<compile_context>
chip_gen: v6e
topology: v6e:2x2x1
jax: 0.10.0
libtpu: 0.0.40
codegen_flags: <defaults>
</compile_context>

<pallas_src>
import math

import jax
import jax.numpy as jnp
from jax import lax
from jax.experimental import pallas as pl
from jax.experimental.pallas import tpu as pltpu


# -----------------------------------------------------------------------------
# Helpers
# -----------------------------------------------------------------------------
def _round_up(x, m):
    return (x + m - 1) // m * m


def _m_tiling(M):
    """Pick an M tile that divides the padded M and keeps >=2 blocks when M is large."""
    if M >= 2048:
        tm = 512
    elif M >= 512:
        tm = 256
    elif M >= 128:
        tm = 64
    else:
        tm = _round_up(max(M, 1), 8)
    Mp = _round_up(M, tm)
    return Mp, tm


def _vmem_limit(block_bytes):
    """Derive the scoped-VMEM limit from the double-buffered block footprint (<=48MiB)."""
    est = 2 * block_bytes + 4 * 1024 * 1024
    return int(min(48 * 1024 * 1024, max(16 * 1024 * 1024, est)))


_WEIGHT_RESIDENT_BUDGET = 8 * 1024 * 1024  # bf16 bytes; above this, tile N and K


# -----------------------------------------------------------------------------
# Pallas kernels
# -----------------------------------------------------------------------------
def _make_kernel_a(relu, has_res):
    """Weight-resident matmul: out = act( (a @ b) * scale + shift [+ residual] )."""

    def kernel(a_ref, b_ref, s_ref, t_ref, *rest):
        if has_res:
            r_ref, o_ref = rest
        else:
            (o_ref,) = rest
        acc = jnp.dot(a_ref[...], b_ref[...], preferred_element_type=jnp.float32)
        y = acc * s_ref[...] + t_ref[...]
        if has_res:
            y = y + r_ref[...].astype(jnp.float32)
        if relu:
            y = jnp.maximum(y, 0.0)
        o_ref[...] = y.astype(o_ref.dtype)

    return kernel


def _make_kernel_b(relu, has_res):
    """(M,N,K)-tiled matmul with fp32 VMEM accumulator; epilogue fused at the last K step."""

    def kernel(a_ref, b_ref, s_ref, t_ref, *rest):
        if has_res:
            r_ref, o_ref, acc_ref = rest
        else:
            o_ref, acc_ref = rest
        k = pl.program_id(2)

        @pl.when(k == 0)
        def _():
            acc_ref[...] = jnp.zeros_like(acc_ref)

        acc_ref[...] += jnp.dot(a_ref[...], b_ref[...],
                                preferred_element_type=jnp.float32)

        @pl.when(k == pl.num_programs(2) - 1)
        def _():
            y = acc_ref[...] * s_ref[...] + t_ref[...]
            if has_res:
                y = y + r_ref[...].astype(jnp.float32)
            if relu:
                y = jnp.maximum(y, 0.0)
            o_ref[...] = y.astype(o_ref.dtype)

    return kernel


def _normalize_kernel(x_ref, m_ref, inv_ref, o_ref):
    # fp32 math, bf16 store
    o_ref[...] = ((x_ref[...] - m_ref[...]) * inv_ref[...]).astype(o_ref.dtype)


# -----------------------------------------------------------------------------
# Pallas wrappers
# -----------------------------------------------------------------------------
def matmul_fused(a, p, relu=False, residual=None, out_dtype=jnp.bfloat16):
    """a: (M, K) activations.  p: packed layer params (bf16 weight, fp32 scale/shift)."""
    M, K = a.shape
    assert K == p["K"], (K, p["K"])
    Kp, N, Np = p["Kp"], p["N"], p["Np"]

    a = a.astype(jnp.bfloat16)
    Mp, tm = _m_tiling(M)
    if Mp != M or Kp != K:
        a = jnp.pad(a, ((0, Mp - M), (0, Kp - K)))

    res = None
    if residual is not None:
        res = residual.astype(jnp.bfloat16)
        if Mp != M or Np != N:
            res = jnp.pad(res, ((0, Mp - M), (0, Np - N)))
    has_res = res is not None
    obytes = jnp.dtype(out_dtype).itemsize

    if p["mode"] == "A":
        # Full weight resident in VMEM; grid over M only (weight DMA'd once).
        grid = (Mp // tm,)
        in_specs = [
            pl.BlockSpec((tm, Kp), lambda i: (i, 0)),
            pl.BlockSpec((Kp, Np), lambda i: (0, 0)),
            pl.BlockSpec((1, Np), lambda i: (0, 0)),
            pl.BlockSpec((1, Np), lambda i: (0, 0)),
        ]
        args = [a, p["wb"], p["s"], p["t"]]
        if has_res:
            in_specs.append(pl.BlockSpec((tm, Np), lambda i: (i, 0)))
            args.append(res)
        blk = (tm * Kp * 2 + Kp * Np * 2 + 2 * Np * 4 + tm * Np * obytes
               + (tm * Np * 2 if has_res else 0))
        out = pl.pallas_call(
            _make_kernel_a(relu, has_res),
            out_shape=jax.ShapeDtypeStruct((Mp, Np), out_dtype),
            grid=grid,
            in_specs=in_specs,
            out_specs=pl.BlockSpec((tm, Np), lambda i: (i, 0)),
            compiler_params=pltpu.CompilerParams(
                dimension_semantics=("parallel",),
                vmem_limit_bytes=_vmem_limit(blk),
            ),
        )(*args)
    else:
        # Large weight: tile M, N and K; fp32 accumulator scratch in VMEM.
        tk, tn = p["tk"], p["tn"]
        grid = (Mp // tm, Np // tn, Kp // tk)
        in_specs = [
            pl.BlockSpec((tm, tk), lambda i, j, k: (i, k)),
            pl.BlockSpec((tk, tn), lambda i, j, k: (k, j)),
            pl.BlockSpec((1, tn), lambda i, j, k: (0, j)),
            pl.BlockSpec((1, tn), lambda i, j, k: (0, j)),
        ]
        args = [a, p["wb"], p["s"], p["t"]]
        if has_res:
            in_specs.append(pl.BlockSpec((tm, tn), lambda i, j, k: (i, j)))
            args.append(res)
        blk = (tm * tk * 2 + tk * tn * 2 + 2 * tn * 4 + tm * tn * obytes
               + tm * tn * 4 + (tm * tn * 2 if has_res else 0))
        out = pl.pallas_call(
            _make_kernel_b(relu, has_res),
            out_shape=jax.ShapeDtypeStruct((Mp, Np), out_dtype),
            grid=grid,
            in_specs=in_specs,
            out_specs=pl.BlockSpec((tm, tn), lambda i, j, k: (i, j)),
            scratch_shapes=[pltpu.VMEM((tm, tn), jnp.float32)],
            compiler_params=pltpu.CompilerParams(
                dimension_semantics=("parallel", "parallel", "arbitrary"),
                vmem_limit_bytes=_vmem_limit(blk),
            ),
        )(*args)

    if Mp != M or Np != N:
        out = out[:M, :N]
    return out


def normalize_input(x_nhwc, mean, std):
    """Per-channel (x - mean) / std, tiled over rows; fp32 in, bf16 out."""
    B, H, W, C = x_nhwc.shape
    rows = B * H * W
    xr = x_nhwc.reshape(rows, C).astype(jnp.float32)
    Mp, tm = _m_tiling(rows)
    if Mp != rows:
        xr = jnp.pad(xr, ((0, Mp - rows), (0, 0)))
    m = mean.reshape(1, C).astype(jnp.float32)
    inv = (1.0 / std).reshape(1, C).astype(jnp.float32)
    out = pl.pallas_call(
        _normalize_kernel,
        out_shape=jax.ShapeDtypeStruct((Mp, C), jnp.bfloat16),
        grid=(Mp // tm,),
        in_specs=[
            pl.BlockSpec((tm, C), lambda i: (i, 0)),
            pl.BlockSpec((1, C), lambda i: (0, 0)),
            pl.BlockSpec((1, C), lambda i: (0, 0)),
        ],
        out_specs=pl.BlockSpec((tm, C), lambda i: (i, 0)),
        compiler_params=pltpu.CompilerParams(dimension_semantics=("parallel",)),
    )(xr, m, inv)
    return out[:rows].reshape(B, H, W, C)


# -----------------------------------------------------------------------------
# Convolution = im2col (bf16 glue) + Pallas fused matmul (hot path)
# -----------------------------------------------------------------------------
def conv2d(x, p, stride=1, pad=0, relu=False, residual=None, out_dtype=jnp.bfloat16):
    """x: (N,H,W,Cin) NHWC.  p: packed conv params (kh,kw,cin + bf16 (Kp,Np) weight)."""
    kh, kw, cin = p["kh"], p["kw"], p["cin"]
    B, H, W, C = x.shape
    assert C == cin, (C, cin)
    x = x.astype(jnp.bfloat16)
    if pad > 0:
        x = jnp.pad(x, ((0, 0), (pad, pad), (pad, pad), (0, 0)))
    Hp, Wp = x.shape[1], x.shape[2]
    Ho = (Hp - kh) // stride + 1
    Wo = (Wp - kw) // stride + 1
    if kh == 1 and kw == 1:
        patches = x[:, :(Ho - 1) * stride + 1:stride, :(Wo - 1) * stride + 1:stride, :]
    else:
        # TODO(synk): im2col still materializes kh*kw shifted copies (now in bf16);
        #             a manual-DMA tap-accumulation conv would remove this round-trip.
        cols = [x[:, i:i + (Ho - 1) * stride + 1:stride,
                  j:j + (Wo - 1) * stride + 1:stride, :]
                for i in range(kh) for j in range(kw)]
        patches = jnp.concatenate(cols, axis=-1)
    a = patches.reshape(B * Ho * Wo, kh * kw * cin)
    res = None
    if residual is not None:
        res = residual.reshape(B * Ho * Wo, residual.shape[-1])
    y = matmul_fused(a, p, relu=relu, residual=res, out_dtype=out_dtype)
    return y.reshape(B, Ho, Wo, p["N"])


# -----------------------------------------------------------------------------
# Deterministic parameter construction (pre-folded, pre-padded, pre-cast)
# -----------------------------------------------------------------------------
class PG:
    def __init__(self, seed=0):
        self.key = jax.random.PRNGKey(seed)
        self.count = 0

    def normal(self, shape, std):
        self.count += 1
        k = jax.random.fold_in(self.key, self.count)
        return std * jax.random.normal(k, shape, jnp.float32)


def _he(k, cin):
    return 1.0 / math.sqrt(k * k * cin)


def pack_linear(w2d, scale, shift):
    """Fold BN into scale/shift, pad once to TPU-friendly shapes, cast weight to bf16."""
    K, N = w2d.shape
    if K * N * 2 <= _WEIGHT_RESIDENT_BUDGET:
        mode, tk = "A", None
        tn = Np = _round_up(N, 128)
        Kp = K  # full-dim block, no K padding needed
    else:
        mode = "B"
        tn = 256 if N % 256 == 0 else 128
        Np = _round_up(N, tn)
        tk = next((c for c in (1152, 1024, 768, 512, 384, 256, 128) if K % c == 0), 512)
        Kp = _round_up(K, tk)
    if Kp == K and Np == N:
        wb = w2d.astype(jnp.bfloat16)
    else:
        wb = jnp.zeros((Kp, Np), jnp.bfloat16).at[:K, :N].set(w2d.astype(jnp.bfloat16))
    s = jnp.zeros((1, Np), jnp.float32).at[0, :N].set(scale.astype(jnp.float32))
    t = jnp.zeros((1, Np), jnp.float32).at[0, :N].set(shift.astype(jnp.float32))
    return dict(mode=mode, wb=wb, s=s, t=t, K=K, N=N, Kp=Kp, Np=Np, tk=tk, tn=tn)


def make_conv(pg, cin, cout, k, bn=True):
    w = pg.normal((k, k, cin, cout), _he(k, cin))
    if bn:  # conv (no bias) + inference-mode BN folded into scale/shift
        scale = 1.0 + 0.05 * pg.normal((cout,), 1.0)
        shift = 0.05 * pg.normal((cout,), 1.0)
    else:   # conv with bias
        scale = jnp.ones((cout,), jnp.float32)
        shift = 0.05 * pg.normal((cout,), 1.0)
    packed = pack_linear(w.reshape(k * k * cin, cout), scale, shift)
    packed.update(kh=k, kw=k, cin=cin)
    return packed


def bottleneck_params(pg, cin, width, stride):
    p = dict(
        stride=stride,
        c1=make_conv(pg, cin, width, 1),
        c2=make_conv(pg, width, width, 3),
        c3=make_conv(pg, width, width * 4, 1),
    )
    if stride != 1 or cin != width * 4:
        p["ds"] = make_conv(pg, cin, width * 4, 1)
    return p


def resnet50_params(pg):
    params = dict(conv1=make_conv(pg, 3, 64, 7))
    layers = []
    cin = 64
    for width, blocks, stride in [(64, 3, 1), (128, 4, 2), (256, 6, 2), (512, 3, 2)]:
        blist = []
        for bi in range(blocks):
            s = stride if bi == 0 else 1
            blist.append(bottleneck_params(pg, cin, width, s))
            cin = width * 4
        layers.append(blist)
    params["layers"] = layers
    return params


def decoder_params(pg, cin, cmid, cout):
    return dict(c1=make_conv(pg, cin, cmid, 3), c2=make_conv(pg, cmid, cout, 3))


def build_params(num_classes, seed=0):
    pg = PG(seed)
    return dict(
        encoder=resnet50_params(pg),
        dec1=decoder_params(pg, 2048 + 1024, 1024, 512),
        dec2=decoder_params(pg, 512 + 512, 512, 256),
        dec3=decoder_params(pg, 256 + 256, 256, 128),
        logit=make_conv(pg, 128, num_classes, 1, bn=False),
    )


# -----------------------------------------------------------------------------
# Forward passes
# -----------------------------------------------------------------------------
def bottleneck_fwd(x, p):
    if "ds" in p:
        identity = conv2d(x, p["ds"], stride=p["stride"], pad=0, relu=False)
    else:
        identity = x
    out = conv2d(x, p["c1"], stride=1, pad=0, relu=True)
    out = conv2d(out, p["c2"], stride=p["stride"], pad=1, relu=True)
    # residual add + ReLU fused into the c3 matmul epilogue (no separate pass)
    out = conv2d(out, p["c3"], stride=1, pad=0, relu=True, residual=identity)
    return out


def resnet50_fwd(x, p):
    x = conv2d(x, p["conv1"], stride=2, pad=3, relu=True)
    x = lax.reduce_window(
        x, jnp.asarray(-jnp.inf, x.dtype), lax.max,
        window_dimensions=(1, 3, 3, 1),
        window_strides=(1, 2, 2, 1),
        padding=((0, 0), (1, 1), (1, 1), (0, 0)),
    )
    feats = []
    for blist in p["layers"]:
        for bp in blist:
            x = bottleneck_fwd(x, bp)
        feats.append(x)
    return feats  # e1 (s4,256), e2 (s8,512), e3 (s16,1024), e4 (s32,2048)


def _up2_nearest(x):
    return jnp.repeat(jnp.repeat(x, 2, axis=1), 2, axis=2)


def unet_decoder_fwd(x, skip, p):
    # TODO(synk): L.UNetDecoder internals are not in the reference source; assumed
    #             nearest 2x upsample -> concat(skip) -> two 3x3 Conv+BN+ReLU blocks.
    x = _up2_nearest(x)
    x = jnp.concatenate([x, skip.astype(x.dtype)], axis=-1)
    x = conv2d(x, p["c1"], stride=1, pad=1, relu=True)
    x = conv2d(x, p["c2"], stride=1, pad=1, relu=True)
    return x


IMAGENET_MEAN = jnp.array([0.485, 0.456, 0.406], jnp.float32)
IMAGENET_STD = jnp.array([0.229, 0.224, 0.225], jnp.float32)


def unet_r50_forward(x_nchw, params, num_classes):
    """x_nchw: (B, 3, H, W) float32.  Returns [seg_logits (B, num_classes, H, W)]."""
    B, C, H, W = x_nchw.shape
    x = jnp.transpose(x_nchw, (0, 2, 3, 1)).astype(jnp.float32)  # -> NHWC
    x = normalize_input(x, IMAGENET_MEAN, IMAGENET_STD)          # -> bf16

    e1, e2, e3, e4 = resnet50_fwd(x, params["encoder"])
    d = unet_decoder_fwd(e4, e3, params["dec1"])   # stride 16, 512 ch
    d = unet_decoder_fwd(d, e2, params["dec2"])    # stride 8,  256 ch
    d = unet_decoder_fwd(d, e1, params["dec3"])    # stride 4,  128 ch

    logit = conv2d(d, params["logit"], stride=1, pad=0, relu=False,
                   out_dtype=jnp.float32)          # (B, H/4, W/4, nc)
    logit_up = jax.image.resize(
        logit, (B, H, W, num_classes), method="bilinear"
    )  # bilinear, align_corners=False semantics
    return [jnp.transpose(logit_up, (0, 3, 1, 2))]  # back to NCHW


# -----------------------------------------------------------------------------
# Main
# -----------------------------------------------------------------------------
if __name__ == "__main__":
    num_classes = 4
    B, H, W = 2, 64, 64  # RGB input, spatial divisible by the encoder stride (32)
    key = jax.random.PRNGKey(0)
    x = jax.random.uniform(key, (B, 3, H, W), jnp.float32)

    params = build_params(num_classes, seed=0)
    outs = unet_r50_forward(x, params, num_classes)
    outs = jax.block_until_ready(outs)

    (seg_logit,) = outs
    assert seg_logit.shape == (B, num_classes, H, W), seg_logit.shape
    assert bool(jnp.isfinite(seg_logit).all())
    print("KERNEL_OK")
</pallas_src>

<mosaic_0001>
module attributes {stable_mosaic.version = 11 : i64} {
  func.func @_normalize_kernel(%arg0: i32, %arg1: memref<512x3xf32, #tpu.memory_space<vmem>>, %arg2: memref<1x3xf32, #tpu.memory_space<vmem>>, %arg3: memref<1x3xf32, #tpu.memory_space<vmem>>, %arg4: memref<512x3xbf16, #tpu.memory_space<vmem>>) attributes {dimension_semantics = [#tpu.dimension_semantics<parallel>], iteration_bounds = array<i64: 16>, scalar_prefetch = 0 : i64, scratch_operands = 0 : i64, tpu.core_type = #tpu.core_type<tc>, window_params = [{transform_indices = @transform_0, window_bounds = array<i64: 512, 3>}, {pipeline_mode = #tpu.pipeline_mode<synchronous>, transform_indices = @transform_1, window_bounds = array<i64: 1, 3>}, {pipeline_mode = #tpu.pipeline_mode<synchronous>, transform_indices = @transform_2, window_bounds = array<i64: 1, 3>}, {transform_indices = @transform_3, window_bounds = array<i64: 512, 3>}]} {
    %c0 = arith.constant 0 : index
    %c0_0 = arith.constant 0 : index
    %0 = vector.load %arg1[%c0, %c0_0] : memref<512x3xf32, #tpu.memory_space<vmem>>, vector<512x3xf32>
    %c0_1 = arith.constant 0 : index
    %c0_2 = arith.constant 0 : index
    %1 = vector.load %arg2[%c0_1, %c0_2] : memref<1x3xf32, #tpu.memory_space<vmem>>, vector<1x3xf32>
    %2 = vector.broadcast %1 : vector<1x3xf32> to vector<512x3xf32>
    %3 = arith.subf %0, %2 : vector<512x3xf32>
    %c0_3 = arith.constant 0 : index
    %c0_4 = arith.constant 0 : index
    %4 = vector.load %arg3[%c0_3, %c0_4] : memref<1x3xf32, #tpu.memory_space<vmem>>, vector<1x3xf32>
    %5 = vector.broadcast %4 : vector<1x3xf32> to vector<512x3xf32>
    %6 = arith.mulf %3, %5 : vector<512x3xf32>
    %7 = arith.truncf %6 : vector<512x3xf32> to vector<512x3xbf16>
    %c0_5 = arith.constant 0 : index
    %c0_6 = arith.constant 0 : index
    %8 = vector.load %arg4[%c0_5, %c0_6] : memref<512x3xbf16, #tpu.memory_space<vmem>>, vector<512x3xbf16>
    tpu.vector_store %arg4[%c0_5, %c0_6], %7 {strides = array<i32>} : memref<512x3xbf16, #tpu.memory_space<vmem>>, vector<512x3xbf16>,
    return
  }
  func.func @transform_0(%arg0: i32) -> (i32, i32) {
    %c0_i32 = arith.constant 0 : i32
    %c0_i32_0 = arith.constant 0 : i32
    return %arg0, %c0_i32 : i32, i32
  }
  func.func @transform_1(%arg0: i32) -> (i32, i32) {
    %c0_i32 = arith.constant 0 : i32
    %c0_i32_0 = arith.constant 0 : i32
    %c0_i32_1 = arith.constant 0 : i32
    return %c0_i32, %c0_i32_0 : i32, i32
  }
  func.func @transform_2(%arg0: i32) -> (i32, i32) {
    %c0_i32 = arith.constant 0 : i32
    %c0_i32_0 = arith.constant 0 : i32
    %c0_i32_1 = arith.constant 0 : i32
    return %c0_i32, %c0_i32_0 : i32, i32
  }
  func.func @transform_3(%arg0: i32) -> (i32, i32) {
    %c0_i32 = arith.constant 0 : i32
    %c0_i32_0 = arith.constant 0 : i32
    return %arg0, %c0_i32 : i32, i32
  }
}

</mosaic_0001>

<llo_original>
// kernel: tpu_custom_call.1
$region0: #{tpu_custom_call.1}
  #allocation0 [shape = 'u32[]', space=smem, size = 0x4, offset = 0x4, fixed_abs, tag = 'smem constant byte address 0x4 - core index']
  #allocation1 [shape = 'u32[144,128]{1,0:T(1,128)}', space=vmem, size = 0x12000, scoped, tag = 'internal scratch']
  %s0 = inlined_call_operand.vmem [shape: f32[8192,3], index: 0, kind: input, shape index: {}]
  %s1 = inlined_call_operand.vmem [shape: f32[1,3], index: 1, kind: input, shape index: {}]
  %s2 = inlined_call_operand.vmem [shape: f32[1,3], index: 2, kind: input, shape index: {}]
  %s3 = inlined_call_operand.vmem [shape: bf16[8192,3], index: 3, kind: output, shape index: {}]
  %s4 = sld [smem:[#allocation0]]
  $region45: #{tpu_custom_call.1} parent=0
    _
  %s6 = ssub.s32 1, %s4
  %s7 = scalar_select 0, %s6, %s4
  loop: start=0, step=1, limit=18
  $region2: #{tpu_custom_call.1} parent=0 // loop_pre_header
    _
  $region3: #{tpu_custom_call.1} parent=0 // loop_header
    %s9 = sphi 0, %s13
    %p10 = scmp.ge.s32.totalorder %s9, 18
    %s19 = sphi 0, %s21
    %s22 = sphi 0, %s19
    %s23 = sphi 0, %s22
    %s39 = sphi 0, %s23
    %s43 = sphi 0, %s43
    %s45 = sphi 0, %s43
    %s46 = sphi 0, %s45
    %s60 = sphi 0, %s46
    %s64 = sphi 0, %s64
    %s66 = sphi 0, %s64
    %s67 = sphi 0, %s66
    %s81 = sphi 0, %s67
    %s87 = sphi 0, %s89
    %s90 = sphi 0, %s87
    %s91 = sphi 0, %s90
    %s107 = sphi 0, %s91
  $region4: #{tpu_custom_call.1} parent=0 // loop_header_branch
    %12 = sbr.rel (%p10) target = $region8
  $region5: #{tpu_custom_call.1} parent=0 // loop_body
    %s14 = ssub.s32 %s9, 1
    %s15 = ssub.s32 %s9, 2
    %s16 = sadd.s32 %s9, 1
    %s17 = ssub.s32 %s9, %s16
    %p18 = scmp.eq.s32.totalorder %s17, 0
    %s20 = sadd.s32 %s19, 1
    %s21 = scalar_select %p18, %s19, %s20
    %p24 = pneg %p18
    %p25 = scmp.eq.s32.totalorder %s9, 15
    %p26 = por %p24, %p25
    %p27 = scmp.ne.s32.totalorder %s19, %s22
    %p28 = scmp.eq.s32.totalorder %s9, 0
    %p29 = por %p27, %p28
    %p30 = scmp.ne.s32.totalorder %s19, %s22
    %p31 = scmp.eq.s32.totalorder %s14, 15
    %p32 = por %p30, %p31
    %p33 = scmp.ne.s32.totalorder %s22, %s23
    %p34 = scmp.eq.s32.totalorder %s14, 0
    %p35 = por %p33, %p34
    %p36 = scmp.ne.s32.totalorder %s22, %s23
    %p37 = scmp.eq.s32.totalorder %s15, 15
    %p38 = por %p36, %p37
    %p40 = scmp.ne.s32.totalorder %s23, %s39
    %p41 = scmp.eq.s32.totalorder %s15, 0
    %p42 = por %p40, %p41
    %s44 = sadd.s32 %s43, 1
    %p47 = scmp.eq.s32.totalorder %s9, 15
    %p48 = scmp.ne.s32.totalorder %s43, %s45
    %p49 = scmp.eq.s32.totalorder %s9, 0
    %p50 = por %p48, %p49
    %p51 = scmp.ne.s32.totalorder %s43, %s45
    %p52 = scmp.eq.s32.totalorder %s14, 15
    %p53 = por %p51, %p52
    %p54 = scmp.ne.s32.totalorder %s45, %s46
    %p55 = scmp.eq.s32.totalorder %s14, 0
    %p56 = por %p54, %p55
    %p57 = scmp.ne.s32.totalorder %s45, %s46
    %p58 = scmp.eq.s32.totalorder %s15, 15
    %p59 = por %p57, %p58
    %p61 = scmp.ne.s32.totalorder %s46, %s60
    %p62 = scmp.eq.s32.totalorder %s15, 0
    %p63 = por %p61, %p62
    %s65 = sadd.s32 %s64, 1
    %p68 = scmp.eq.s32.totalorder %s9, 15
    %p69 = scmp.ne.s32.totalorder %s64, %s66
    %p70 = scmp.eq.s32.totalorder %s9, 0
    %p71 = por %p69, %p70
    %p72 = scmp.ne.s32.totalorder %s64, %s66
    %p73 = scmp.eq.s32.totalorder %s14, 15
    %p74 = por %p72, %p73
    %p75 = scmp.ne.s32.totalorder %s66, %s67
    %p76 = scmp.eq.s32.totalorder %s14, 0
    %p77 = por %p75, %p76
    %p78 = scmp.ne.s32.totalorder %s66, %s67
    %p79 = scmp.eq.s32.totalorder %s15, 15
    %p80 = por %p78, %p79
    %p82 = scmp.ne.s32.totalorder %s67, %s81
    %p83 = scmp.eq.s32.totalorder %s15, 0
    %p84 = por %p82, %p83
    %s85 = ssub.s32 %s9, %s16
    %p86 = scmp.eq.s32.totalorder %s85, 0
    %s88 = sadd.s32 %s87, 1
    %s89 = scalar_select %p86, %s87, %s88
    %p92 = pneg %p86
    %p93 = scmp.eq.s32.totalorder %s9, 15
    %p94 = por %p92, %p93
    %p95 = scmp.ne.s32.totalorder %s87, %s90
    %p96 = scmp.eq.s32.totalorder %s9, 0
    %p97 = por %p95, %p96
    %p98 = scmp.ne.s32.totalorder %s87, %s90
    %p99 = scmp.eq.s32.totalorder %s14, 15
    %p100 = por %p98, %p99
    %p101 = scmp.ne.s32.totalorder %s90, %s91
    %p102 = scmp.eq.s32.totalorder %s14, 0
    %p103 = por %p101, %p102
    %p104 = scmp.ne.s32.totalorder %s90, %s91
    %p105 = scmp.eq.s32.totalorder %s15, 15
    %p106 = por %p104, %p105
    %p108 = scmp.ne.s32.totalorder %s91, %s107
    %p109 = scmp.eq.s32.totalorder %s15, 0
    %p110 = por %p108, %p109
    %p111 = scmp.le.s32.totalorder 1, %s9
    %p112 = scmp.lt.s32.totalorder %s9, 17
    %p113 = pnand %p111, %p112
    %p114 = pneg %p113
    // Predicated region
    $region9: #{tpu_custom_call.1} parent=5 // pred_check
      _
    $region10: #{tpu_custom_call.1} parent=5 // pred_check_branch
      %116 = sbr.rel (%p113) target = $region12
    $region11: #{tpu_custom_call.1} parent=5 // pred_region
      %s117 = ssub.s32 %s9, 1
      // Predicated region
      $region13: #{tpu_custom_call.1} parent=11 // pred_check
        %p118 = pneg %p56
      $region14: #{tpu_custom_call.1} parent=11 // pred_check_branch
        %120 = sbr.rel (%p118) target = $region16
      $region15: #{tpu_custom_call.1} parent=11 // pred_region
        _
      $region16: #{tpu_custom_call.1} parent=11 // pred_fallthru
        _
      // Predicated region
      $region17: #{tpu_custom_call.1} parent=11 // pred_check
        %p121 = pneg %p77
      $region18: #{tpu_custom_call.1} parent=11 // pred_check_branch
        %123 = sbr.rel (%p121) target = $region20
      $region19: #{tpu_custom_call.1} parent=11 // pred_region
        _
      $region20: #{tpu_custom_call.1} parent=11 // pred_fallthru
        _
    $region12: #{tpu_custom_call.1} parent=5 // pred_fallthru
      _
    %p124 = scmp.lt.s32.totalorder %s9, 16
    // Predicated region
    $region21: #{tpu_custom_call.1} parent=5 // pred_check
      %p125 = pneg %p124
    $region22: #{tpu_custom_call.1} parent=5 // pred_check_branch
      %127 = sbr.rel (%p125) target = $region24
    $region23: #{tpu_custom_call.1} parent=5 // pred_region
      // Predicated region
      $region25: #{tpu_custom_call.1} parent=23 // pred_check
        %p128 = pneg %p29
      $region26: #{tpu_custom_call.1} parent=23 // pred_check_branch
        %130 = sbr.rel (%p128) target = $region28
      $region27: #{tpu_custom_call.1} parent=23 // pred_region
        %s131 = smul.u32 64, %s9
        %p132 = scmp.lt.s32.totalorder %s131, 1023
        %s133 = scalar_select %p132, %s131, 1023
        %s134 = smul.addr %s133, 8
        %s135 = scalar_lea.vmem %s0, %s134
        %s136 = smul.u32 64, %s9
      $region28: #{tpu_custom_call.1} parent=23 // pred_fallthru
        _
    $region24: #{tpu_custom_call.1} parent=5 // pred_fallthru
      _
    %p137 = scmp.le.s32.totalorder 1, %s9
    %p138 = scmp.lt.s32.totalorder %s9, 17
    %p139 = pnand %p137, %p138
    %p140 = pneg %p139
    // Predicated region
    $region29: #{tpu_custom_call.1} parent=5 // pred_check
      _
    $region30: #{tpu_custom_call.1} parent=5 // pred_check_branch
      %142 = sbr.rel (%p139) target = $region32
    $region31: #{tpu_custom_call.1} parent=5 // pred_region
      %s143 = ssub.s32 %s9, 1
      %s144 = smul.u32 64, %s14
      %p145 = scmp.lt.s32.totalorder %s144, 1023
      %s146 = scalar_select %p145, %s144, 1023
      %s147 = smul.addr %s146, 8
      %s148 = scalar_lea.vmem %s0, %s147
      %p149 = pneg %p35
      %p150 = pneg %p32
      %p151 = pneg %p56
      %p152 = pneg %p53
      %p153 = pneg %p77
      %p154 = pneg %p74
      %p155 = pneg %p103
      %p156 = pneg %p100
      %s157 = smul.u32 64, %s14
      %p158 = scmp.lt.s32.totalorder %s157, 1023
      %s159 = scalar_select %p158, %s157, 1023
      %s160 = smul.addr %s159, 4
      %s161 = scalar_lea.vmem %s3, %s160
      %s162 = smul.u32 64, %s14
      %p163 = scmp.lt.s32.totalorder %s162, 1023
      %s164 = scalar_select %p163, %s162, 1023
      %s165 = smul.addr %s164, 8
      %s166 = scalar_lea.vmem %s0, %s165
      %s167 = smul.u32 64, %s14
      %s168 = smul.u32 64, %s14
      %p169 = scmp.lt.s32.totalorder %s168, 1023
      %s170 = scalar_select %p169, %s168, 1023
      %s171 = smul.addr %s170, 4
      %s172 = scalar_lea.vmem %s3, %s171
      %s173 = smul.u32 64, %s14
      %v174 = vld [vmem:[%s166] sm:$0xff]
      %v175 = vld [vmem:[%s166 + $0x8] sm:$0xff]
      %v176 = vld [vmem:[%s166 + $0x10] sm:$0xff]
      %v177 = vld [vmem:[%s166 + $0x18] sm:$0xff]
      %v178 = vld [vmem:[%s166 + $0x20] sm:$0xff]
      %v179 = vld [vmem:[%s166 + $0x28] sm:$0xff]
      %v180 = vld [vmem:[%s166 + $0x30] sm:$0xff]
      %v181 = vld [vmem:[%s166 + $0x38] sm:$0xff]
      %v182 = vld [vmem:[%s166 + $0x40] sm:$0xff]
      %v183 = vld [vmem:[%s166 + $0x48] sm:$0xff]
      %v184 = vld [vmem:[%s166 + $0x50] sm:$0xff]
      %v185 = vld [vmem:[%s166 + $0x58] sm:$0xff]
      %v186 = vld [vmem:[%s166 + $0x60] sm:$0xff]
      %v187 = vld [vmem:[%s166 + $0x68] sm:$0xff]
      %v188 = vld [vmem:[%s166 + $0x70] sm:$0xff]
      %v189 = vld [vmem:[%s166 + $0x78] sm:$0xff]
      %v190 = vld [vmem:[%s166 + $0x80] sm:$0xff]
      %v191 = vld [vmem:[%s166 + $0x88] sm:$0xff]
      %v192 = vld [vmem:[%s166 + $0x90] sm:$0xff]
      %v193 = vld [vmem:[%s166 + $0x98] sm:$0xff]
      %v194 = vld [vmem:[%s166 + $0xa0] sm:$0xff]
      %v195 = vld [vmem:[%s166 + $0xa8] sm:$0xff]
      %v196 = vld [vmem:[%s166 + $0xb0] sm:$0xff]
      %v197 = vld [vmem:[%s166 + $0xb8] sm:$0xff]
      %v198 = vld [vmem:[%s166 + $0xc0] sm:$0xff]
      %v199 = vld [vmem:[%s166 + $0xc8] sm:$0xff]
      %v200 = vld [vmem:[%s166 + $0xd0] sm:$0xff]
      %v201 = vld [vmem:[%s166 + $0xd8] sm:$0xff]
      %v202 = vld [vmem:[%s166 + $0xe0] sm:$0xff]
      %v203 = vld [vmem:[%s166 + $0xe8] sm:$0xff]
      %v204 = vld [vmem:[%s166 + $0xf0] sm:$0xff]
      %v205 = vld [vmem:[%s166 + $0xf8] sm:$0xff]
      %v206 = vld [vmem:[%s166 + $0x100] sm:$0xff]
      %v207 = vld [vmem:[%s166 + $0x108] sm:$0xff]
      %v208 = vld [vmem:[%s166 + $0x110] sm:$0xff]
      %v209 = vld [vmem:[%s166 + $0x118] sm:$0xff]
      %v210 = vld [vmem:[%s166 + $0x120] sm:$0xff]
      %v211 = vld [vmem:[%s166 + $0x128] sm:$0xff]
      %v212 = vld [vmem:[%s166 + $0x130] sm:$0xff]
      %v213 = vld [vmem:[%s166 + $0x138] sm:$0xff]
      %v214 = vld [vmem:[%s166 + $0x140] sm:$0xff]
      %v215 = vld [vmem:[%s166 + $0x148] sm:$0xff]
      %v216 = vld [vmem:[%s166 + $0x150] sm:$0xff]
      %v217 = vld [vmem:[%s166 + $0x158] sm:$0xff]
      %v218 = vld [vmem:[%s166 + $0x160] sm:$0xff]
      %v219 = vld [vmem:[%s166 + $0x168] sm:$0xff]
      %v220 = vld [vmem:[%s166 + $0x170] sm:$0xff]
      %v221 = vld [vmem:[%s166 + $0x178] sm:$0xff]
      %v222 = vld [vmem:[%s166 + $0x180] sm:$0xff]
      %v223 = vld [vmem:[%s166 + $0x188] sm:$0xff]
      %v224 = vld [vmem:[%s166 + $0x190] sm:$0xff]
      %v225 = vld [vmem:[%s166 + $0x198] sm:$0xff]
      %v226 = vld [vmem:[%s166 + $0x1a0] sm:$0xff]
      %v227 = vld [vmem:[%s166 + $0x1a8] sm:$0xff]
      %v228 = vld [vmem:[%s166 + $0x1b0] sm:$0xff]
      %v229 = vld [vmem:[%s166 + $0x1b8] sm:$0xff]
      %v230 = vld [vmem:[%s166 + $0x1c0] sm:$0xff]
      %v231 = vld [vmem:[%s166 + $0x1c8] sm:$0xff]
      %v232 = vld [vmem:[%s166 + $0x1d0] sm:$0xff]
      %v233 = vld [vmem:[%s166 + $0x1d8] sm:$0xff]
      %v234 = vld [vmem:[%s166 + $0x1e0] sm:$0xff]
      %v235 = vld [vmem:[%s166 + $0x1e8] sm:$0xff]
      %v236 = vld [vmem:[%s166 + $0x1f0] sm:$0xff]
      %v237 = vld [vmem:[%s166 + $0x1f8] sm:$0xff]
      %v238 = vld [vmem:[%s1] sm:$0x1]
      %v240 = vlaneseq
      %v241 = vshrl.u32 %v240, 7
      %v242 = vsub.s32 0, %v241
      %v243 = vrot.slane %v238, %v242
      %v245 = vsub.f32 %v174, %v243
      %v246 = vsub.f32 %v175, %v243
      %v247 = vsub.f32 %v176, %v243
      %v248 = vsub.f32 %v177, %v243
      %v249 = vsub.f32 %v178, %v243
      %v250 = vsub.f32 %v179, %v243
      %v251 = vsub.f32 %v180, %v243
      %v252 = vsub.f32 %v181, %v243
      %v253 = vsub.f32 %v182, %v243
      %v254 = vsub.f32 %v183, %v243
      %v255 = vsub.f32 %v184, %v243
      %v256 = vsub.f32 %v185, %v243
      %v257 = vsub.f32 %v186, %v243
      %v258 = vsub.f32 %v187, %v243
      %v259 = vsub.f32 %v188, %v243
      %v260 = vsub.f32 %v189, %v243
      %v261 = vsub.f32 %v190, %v243
      %v262 = vsub.f32 %v191, %v243
      %v263 = vsub.f32 %v192, %v243
      %v264 = vsub.f32 %v193, %v243
      %v265 = vsub.f32 %v194, %v243
      %v266 = vsub.f32 %v195, %v243
      %v267 = vsub.f32 %v196, %v243
      %v268 = vsub.f32 %v197, %v243
      %v269 = vsub.f32 %v198, %v243
      %v270 = vsub.f32 %v199, %v243
      %v271 = vsub.f32 %v200, %v243
      %v272 = vsub.f32 %v201, %v243
      %v273 = vsub.f32 %v202, %v243
      %v274 = vsub.f32 %v203, %v243
      %v275 = vsub.f32 %v204, %v243
      %v276 = vsub.f32 %v205, %v243
      %v277 = vsub.f32 %v206, %v243
      %v278 = vsub.f32 %v207, %v243
      %v279 = vsub.f32 %v208, %v243
      %v280 = vsub.f32 %v209, %v243
      %v281 = vsub.f32 %v210, %v243
      %v282 = vsub.f32 %v211, %v243
      %v283 = vsub.f32 %v212, %v243
      %v284 = vsub.f32 %v213, %v243
      %v285 = vsub.f32 %v214, %v243
      %v286 = vsub.f32 %v215, %v243
      %v287 = vsub.f32 %v216, %v243
      %v288 = vsub.f32 %v217, %v243
      %v289 = vsub.f32 %v218, %v243
      %v290 = vsub.f32 %v219, %v243
      %v291 = vsub.f32 %v220, %v243
      %v292 = vsub.f32 %v221, %v243
      %v293 = vsub.f32 %v222, %v243
      %v294 = vsub.f32 %v223, %v243
      %v295 = vsub.f32 %v224, %v243
      %v296 = vsub.f32 %v225, %v243
      %v297 = vsub.f32 %v226, %v243
      %v298 = vsub.f32 %v227, %v243
      %v299 = vsub.f32 %v228, %v243
      %v300 = vsub.f32 %v229, %v243
      %v301 = vsub.f32 %v230, %v243
      %v302 = vsub.f32 %v231, %v243
      %v303 = vsub.f32 %v232, %v243
      %v304 = vsub.f32 %v233, %v243
      %v305 = vsub.f32 %v234, %v243
      %v306 = vsub.f32 %v235, %v243
      %v307 = vsub.f32 %v236, %v243
      %v308 = vsub.f32 %v237, %v243
      %v309 = vld [vmem:[%s2] sm:$0x1]
      %v311 = vlaneseq
      %v312 = vshrl.u32 %v311, 7
      %v313 = vsub.s32 0, %v312
      %v314 = vrot.slane %v309, %v313
      %v316 = vmul.f32 %v245, %v314
      %v317 = vmul.f32 %v246, %v314
      %v318 = vmul.f32 %v247, %v314
      %v319 = vmul.f32 %v248, %v314
      %v320 = vmul.f32 %v249, %v314
      %v321 = vmul.f32 %v250, %v314
      %v322 = vmul.f32 %v251, %v314
      %v323 = vmul.f32 %v252, %v314
      %v324 = vmul.f32 %v253, %v314
      %v325 = vmul.f32 %v254, %v314
      %v326 = vmul.f32 %v255, %v314
      %v327 = vmul.f32 %v256, %v314
      %v328 = vmul.f32 %v257, %v314
      %v329 = vmul.f32 %v258, %v314
      %v330 = vmul.f32 %v259, %v314
      %v331 = vmul.f32 %v260, %v314
      %v332 = vmul.f32 %v261, %v314
      %v333 = vmul.f32 %v262, %v314
      %v334 = vmul.f32 %v263, %v314
      %v335 = vmul.f32 %v264, %v314
      %v336 = vmul.f32 %v265, %v314
      %v337 = vmul.f32 %v266, %v314
      %v338 = vmul.f32 %v267, %v314
      %v339 = vmul.f32 %v268, %v314
      %v340 = vmul.f32 %v269, %v314
      %v341 = vmul.f32 %v270, %v314
      %v342 = vmul.f32 %v271, %v314
      %v343 = vmul.f32 %v272, %v314
      %v344 = vmul.f32 %v273, %v314
      %v345 = vmul.f32 %v274, %v314
      %v346 = vmul.f32 %v275, %v314
      %v347 = vmul.f32 %v276, %v314
      %v348 = vmul.f32 %v277, %v314
      %v349 = vmul.f32 %v278, %v314
      %v350 = vmul.f32 %v279, %v314
      %v351 = vmul.f32 %v280, %v314
      %v352 = vmul.f32 %v281, %v314
      %v353 = vmul.f32 %v282, %v314
      %v354 = vmul.f32 %v283, %v314
      %v355 = vmul.f32 %v284, %v314
      %v356 = vmul.f32 %v285, %v314
      %v357 = vmul.f32 %v286, %v314
      %v358 = vmul.f32 %v287, %v314
      %v359 = vmul.f32 %v288, %v314
      %v360 = vmul.f32 %v289, %v314
      %v361 = vmul.f32 %v290, %v314
      %v362 = vmul.f32 %v291, %v314
      %v363 = vmul.f32 %v292, %v314
      %v364 = vmul.f32 %v293, %v314
      %v365 = vmul.f32 %v294, %v314
      %v366 = vmul.f32 %v295, %v314
      %v367 = vmul.f32 %v296, %v314
      %v368 = vmul.f32 %v297, %v314
      %v369 = vmul.f32 %v298, %v314
      %v370 = vmul.f32 %v299, %v314
      %v371 = vmul.f32 %v300, %v314
      %v372 = vmul.f32 %v301, %v314
      %v373 = vmul.f32 %v302, %v314
      %v374 = vmul.f32 %v303, %v314
      %v375 = vmul.f32 %v304, %v314
      %v376 = vmul.f32 %v305, %v314
      %v377 = vmul.f32 %v306, %v314
      %v378 = vmul.f32 %v307, %v314
      %v379 = vmul.f32 %v308, %v314
      %v380 = vpack.c.bf16 %v317, %v316
      %v381 = vpack.c.bf16 %v319, %v318
      %v382 = vpack.c.bf16 %v321, %v320
      %v383 = vpack.c.bf16 %v323, %v322
      %v384 = vpack.c.bf16 %v325, %v324
      %v385 = vpack.c.bf16 %v327, %v326
      %v386 = vpack.c.bf16 %v329, %v328
      %v387 = vpack.c.bf16 %v331, %v330
      %v388 = vpack.c.bf16 %v333, %v332
      %v389 = vpack.c.bf16 %v335, %v334
      %v390 = vpack.c.bf16 %v337, %v336
      %v391 = vpack.c.bf16 %v339, %v338
      %v392 = vpack.c.bf16 %v341, %v340
      %v393 = vpack.c.bf16 %v343, %v342
      %v394 = vpack.c.bf16 %v345, %v344
      %v395 = vpack.c.bf16 %v347, %v346
      %v396 = vpack.c.bf16 %v349, %v348
      %v397 = vpack.c.bf16 %v351, %v350
      %v398 = vpack.c.bf16 %v353, %v352
      %v399 = vpack.c.bf16 %v355, %v354
      %v400 = vpack.c.bf16 %v357, %v356
      %v401 = vpack.c.bf16 %v359, %v358
      %v402 = vpack.c.bf16 %v361, %v360
      %v403 = vpack.c.bf16 %v363, %v362
      %v404 = vpack.c.bf16 %v365, %v364
      %v405 = vpack.c.bf16 %v367, %v366
      %v406 = vpack.c.bf16 %v369, %v368
      %v407 = vpack.c.bf16 %v371, %v370
      %v408 = vpack.c.bf16 %v373, %v372
      %v409 = vpack.c.bf16 %v375, %v374
      %v410 = vpack.c.bf16 %v377, %v376
      %v411 = vpack.c.bf16 %v379, %v378
      %v444 = vunpack.c.l.b16 %v380
      %v445 = vunpack.c.h.b16 %v380
      %v446 = vunpack.c.l.b16 %v381
      %v447 = vunpack.c.h.b16 %v381
      %v448 = vunpack.c.l.b16 %v382
      %v449 = vunpack.c.h.b16 %v382
      %v450 = vunpack.c.l.b16 %v383
      %v451 = vunpack.c.h.b16 %v383
      %v452 = vunpack.c.l.b16 %v384
      %v453 = vunpack.c.h.b16 %v384
      %v454 = vunpack.c.l.b16 %v385
      %v455 = vunpack.c.h.b16 %v385
      %v456 = vunpack.c.l.b16 %v386
      %v457 = vunpack.c.h.b16 %v386
      %v458 = vunpack.c.l.b16 %v387
      %v459 = vunpack.c.h.b16 %v387
      %v460 = vunpack.c.l.b16 %v388
      %v461 = vunpack.c.h.b16 %v388
      %v462 = vunpack.c.l.b16 %v389
      %v463 = vunpack.c.h.b16 %v389
      %v464 = vunpack.c.l.b16 %v390
      %v465 = vunpack.c.h.b16 %v390
      %v466 = vunpack.c.l.b16 %v391
      %v467 = vunpack.c.h.b16 %v391
      %v468 = vunpack.c.l.b16 %v392
      %v469 = vunpack.c.h.b16 %v392
      %v470 = vunpack.c.l.b16 %v393
      %v471 = vunpack.c.h.b16 %v393
      %v472 = vunpack.c.l.b16 %v394
      %v473 = vunpack.c.h.b16 %v394
      %v474 = vunpack.c.l.b16 %v395
      %v475 = vunpack.c.h.b16 %v395
      %v476 = vunpack.c.l.b16 %v396
      %v477 = vunpack.c.h.b16 %v396
      %v478 = vunpack.c.l.b16 %v397
      %v479 = vunpack.c.h.b16 %v397
      %v480 = vunpack.c.l.b16 %v398
      %v481 = vunpack.c.h.b16 %v398
      %v482 = vunpack.c.l.b16 %v399
      %v483 = vunpack.c.h.b16 %v399
      %v484 = vunpack.c.l.b16 %v400
      %v485 = vunpack.c.h.b16 %v400
      %v486 = vunpack.c.l.b16 %v401
      %v487 = vunpack.c.h.b16 %v401
      %v488 = vunpack.c.l.b16 %v402
      %v489 = vunpack.c.h.b16 %v402
      %v490 = vunpack.c.l.b16 %v403
      %v491 = vunpack.c.h.b16 %v403
      %v492 = vunpack.c.l.b16 %v404
      %v493 = vunpack.c.h.b16 %v404
      %v494 = vunpack.c.l.b16 %v405
      %v495 = vunpack.c.h.b16 %v405
      %v496 = vunpack.c.l.b16 %v406
      %v497 = vunpack.c.h.b16 %v406
      %v498 = vunpack.c.l.b16 %v407
      %v499 = vunpack.c.h.b16 %v407
      %v500 = vunpack.c.l.b16 %v408
      %v501 = vunpack.c.h.b16 %v408
      %v502 = vunpack.c.l.b16 %v409
      %v503 = vunpack.c.h.b16 %v409
      %v504 = vunpack.c.l.b16 %v410
      %v505 = vunpack.c.h.b16 %v410
      %v506 = vunpack.c.l.b16 %v411
      %v507 = vunpack.c.h.b16 %v411
      %v508 = vpack.c.b16 %v444, %v444
      %v509 = vpack.c.b16 %v445, %v445
      %v510 = vpack.c.b16 %v446, %v446
      %v511 = vpack.c.b16 %v447, %v447
      %v512 = vpack.c.b16 %v448, %v448
      %v513 = vpack.c.b16 %v449, %v449
      %v514 = vpack.c.b16 %v450, %v450
      %v515 = vpack.c.b16 %v451, %v451
      %v516 = vpack.c.b16 %v452, %v452
      %v517 = vpack.c.b16 %v453, %v453
      %v518 = vpack.c.b16 %v454, %v454
      %v519 = vpack.c.b16 %v455, %v455
      %v520 = vpack.c.b16 %v456, %v456
      %v521 = vpack.c.b16 %v457, %v457
      %v522 = vpack.c.b16 %v458, %v458
      %v523 = vpack.c.b16 %v459, %v459
      %v524 = vpack.c.b16 %v460, %v460
      %v525 = vpack.c.b16 %v461, %v461
      %v526 = vpack.c.b16 %v462, %v462
      %v527 = vpack.c.b16 %v463, %v463
      %v528 = vpack.c.b16 %v464, %v464
      %v529 = vpack.c.b16 %v465, %v465
      %v530 = vpack.c.b16 %v466, %v466
      %v531 = vpack.c.b16 %v467, %v467
      %v532 = vpack.c.b16 %v468, %v468
      %v533 = vpack.c.b16 %v469, %v469
      %v534 = vpack.c.b16 %v470, %v470
      %v535 = vpack.c.b16 %v471, %v471
      %v536 = vpack.c.b16 %v472, %v472
      %v537 = vpack.c.b16 %v473, %v473
      %v538 = vpack.c.b16 %v474, %v474
      %v539 = vpack.c.b16 %v475, %v475
      %v540 = vpack.c.b16 %v476, %v476
      %v541 = vpack.c.b16 %v477, %v477
      %v542 = vpack.c.b16 %v478, %v478
      %v543 = vpack.c.b16 %v479, %v479
      %v544 = vpack.c.b16 %v480, %v480
      %v545 = vpack.c.b16 %v481, %v481
      %v546 = vpack.c.b16 %v482, %v482
      %v547 = vpack.c.b16 %v483, %v483
      %v548 = vpack.c.b16 %v484, %v484
      %v549 = vpack.c.b16 %v485, %v485
      %v550 = vpack.c.b16 %v486, %v486
      %v551 = vpack.c.b16 %v487, %v487
      %v552 = vpack.c.b16 %v488, %v488
      %v553 = vpack.c.b16 %v489, %v489
      %v554 = vpack.c.b16 %v490, %v490
      %v555 = vpack.c.b16 %v491, %v491
      %v556 = vpack.c.b16 %v492, %v492
      %v557 = vpack.c.b16 %v493, %v493
      %v558 = vpack.c.b16 %v494, %v494
      %v559 = vpack.c.b16 %v495, %v495
      %v560 = vpack.c.b16 %v496, %v496
      %v561 = vpack.c.b16 %v497, %v497
      %v562 = vpack.c.b16 %v498, %v498
      %v563 = vpack.c.b16 %v499, %v499
      %v564 = vpack.c.b16 %v500, %v500
      %v565 = vpack.c.b16 %v501, %v501
      %v566 = vpack.c.b16 %v502, %v502
      %v567 = vpack.c.b16 %v503, %v503
      %v568 = vpack.c.b16 %v504, %v504
      %v569 = vpack.c.b16 %v505, %v505
      %v570 = vpack.c.b16 %v506, %v506
      %v571 = vpack.c.b16 %v507, %v507
      %vm636 = vcmask 19456
      %637 = vst.msk [vmem:[%s172] sm:$0xf] %vm636, %v508
      %638 = vst.msk [vmem:[%s172 + $0x4] sm:$0xf] %vm636, %v509
      %639 = vst.msk [vmem:[%s172 + $0x8] sm:$0xf] %vm636, %v510
      %640 = vst.msk [vmem:[%s172 + $0xc] sm:$0xf] %vm636, %v511
      %641 = vst.msk [vmem:[%s172 + $0x10] sm:$0xf] %vm636, %v512
      %642 = vst.msk [vmem:[%s172 + $0x14] sm:$0xf] %vm636, %v513
      %643 = vst.msk [vmem:[%s172 + $0x18] sm:$0xf] %vm636, %v514
      %644 = vst.msk [vmem:[%s172 + $0x1c] sm:$0xf] %vm636, %v515
      %645 = vst.msk [vmem:[%s172 + $0x20] sm:$0xf] %vm636, %v516
      %646 = vst.msk [vmem:[%s172 + $0x24] sm:$0xf] %vm636, %v517
      %647 = vst.msk [vmem:[%s172 + $0x28] sm:$0xf] %vm636, %v518
      %648 = vst.msk [vmem:[%s172 + $0x2c] sm:$0xf] %vm636, %v519
      %649 = vst.msk [vmem:[%s172 + $0x30] sm:$0xf] %vm636, %v520
      %650 = vst.msk [vmem:[%s172 + $0x34] sm:$0xf] %vm636, %v521
      %651 = vst.msk [vmem:[%s172 + $0x38] sm:$0xf] %vm636, %v522
      %652 = vst.msk [vmem:[%s172 + $0x3c] sm:$0xf] %vm636, %v523
      %653 = vst.msk [vmem:[%s172 + $0x40] sm:$0xf] %vm636, %v524
      %654 = vst.msk [vmem:[%s172 + $0x44] sm:$0xf] %vm636, %v525
      %655 = vst.msk [vmem:[%s172 + $0x48] sm:$0xf] %vm636, %v526
      %656 = vst.msk [vmem:[%s172 + $0x4c] sm:$0xf] %vm636, %v527
      %657 = vst.msk [vmem:[%s172 + $0x50] sm:$0xf] %vm636, %v528
      %658 = vst.msk [vmem:[%s172 + $0x54] sm:$0xf] %vm636, %v529
      %659 = vst.msk [vmem:[%s172 + $0x58] sm:$0xf] %vm636, %v530
      %660 = vst.msk [vmem:[%s172 + $0x5c] sm:$0xf] %vm636, %v531
      %661 = vst.msk [vmem:[%s172 + $0x60] sm:$0xf] %vm636, %v532
      %662 = vst.msk [vmem:[%s172 + $0x64] sm:$0xf] %vm636, %v533
      %663 = vst.msk [vmem:[%s172 + $0x68] sm:$0xf] %vm636, %v534
      %664 = vst.msk [vmem:[%s172 + $0x6c] sm:$0xf] %vm636, %v535
      %665 = vst.msk [vmem:[%s172 + $0x70] sm:$0xf] %vm636, %v536
      %666 = vst.msk [vmem:[%s172 + $0x74] sm:$0xf] %vm636, %v537
      %667 = vst.msk [vmem:[%s172 + $0x78] sm:$0xf] %vm636, %v538
      %668 = vst.msk [vmem:[%s172 + $0x7c] sm:$0xf] %vm636, %v539
      %669 = vst.msk [vmem:[%s172 + $0x80] sm:$0xf] %vm636, %v540
      %670 = vst.msk [vmem:[%s172 + $0x84] sm:$0xf] %vm636, %v541
      %671 = vst.msk [vmem:[%s172 + $0x88] sm:$0xf] %vm636, %v542
      %672 = vst.msk [vmem:[%s172 + $0x8c] sm:$0xf] %vm636, %v543
      %673 = vst.msk [vmem:[%s172 + $0x90] sm:$0xf] %vm636, %v544
      %674 = vst.msk [vmem:[%s172 + $0x94] sm:$0xf] %vm636, %v545
      %675 = vst.msk [vmem:[%s172 + $0x98] sm:$0xf] %vm636, %v546
      %676 = vst.msk [vmem:[%s172 + $0x9c] sm:$0xf] %vm636, %v547
      %677 = vst.msk [vmem:[%s172 + $0xa0] sm:$0xf] %vm636, %v548
      %678 = vst.msk [vmem:[%s172 + $0xa4] sm:$0xf] %vm636, %v549
      %679 = vst.msk [vmem:[%s172 + $0xa8] sm:$0xf] %vm636, %v550
      %680 = vst.msk [vmem:[%s172 + $0xac] sm:$0xf] %vm636, %v551
      %681 = vst.msk [vmem:[%s172 + $0xb0] sm:$0xf] %vm636, %v552
      %682 = vst.msk [vmem:[%s172 + $0xb4] sm:$0xf] %vm636, %v553
      %683 = vst.msk [vmem:[%s172 + $0xb8] sm:$0xf] %vm636, %v554
      %684 = vst.msk [vmem:[%s172 + $0xbc] sm:$0xf] %vm636, %v555
      %685 = vst.msk [vmem:[%s172 + $0xc0] sm:$0xf] %vm636, %v556
      %686 = vst.msk [vmem:[%s172 + $0xc4] sm:$0xf] %vm636, %v557
      %687 = vst.msk [vmem:[%s172 + $0xc8] sm:$0xf] %vm636, %v558
      %688 = vst.msk [vmem:[%s172 + $0xcc] sm:$0xf] %vm636, %v559
      %689 = vst.msk [vmem:[%s172 + $0xd0] sm:$0xf] %vm636, %v560
      %690 = vst.msk [vmem:[%s172 + $0xd4] sm:$0xf] %vm636, %v561
      %691 = vst.msk [vmem:[%s172 + $0xd8] sm:$0xf] %vm636, %v562
      %692 = vst.msk [vmem:[%s172 + $0xdc] sm:$0xf] %vm636, %v563
      %693 = vst.msk [vmem:[%s172 + $0xe0] sm:$0xf] %vm636, %v564
      %694 = vst.msk [vmem:[%s172 + $0xe4] sm:$0xf] %vm636, %v565
      %695 = vst.msk [vmem:[%s172 + $0xe8] sm:$0xf] %vm636, %v566
      %696 = vst.msk [vmem:[%s172 + $0xec] sm:$0xf] %vm636, %v567
      %697 = vst.msk [vmem:[%s172 + $0xf0] sm:$0xf] %vm636, %v568
      %698 = vst.msk [vmem:[%s172 + $0xf4] sm:$0xf] %vm636, %v569
      %699 = vst.msk [vmem:[%s172 + $0xf8] sm:$0xf] %vm636, %v570
      %700 = vst.msk [vmem:[%s172 + $0xfc] sm:$0xf] %vm636, %v571
      %s701 = smul.u32 64, %s14
      %p702 = scmp.lt.s32.totalorder %s701, 1023
      %s703 = scalar_select %p702, %s701, 1023
      %s704 = smul.addr %s703, 4
      %s705 = scalar_lea.vmem %s3, %s704
      // Predicated region
      $region33: #{tpu_custom_call.1} parent=31 // pred_check
        %p706 = pneg %p100
      $region34: #{tpu_custom_call.1} parent=31 // pred_check_branch
        %708 = sbr.rel (%p706) target = $region36
      $region35: #{tpu_custom_call.1} parent=31 // pred_region
        %s709 = smul.u32 64, %s14
      $region36: #{tpu_custom_call.1} parent=31 // pred_fallthru
        _
    $region32: #{tpu_custom_call.1} parent=5 // pred_fallthru
      _
    %p710 = scmp.le.s32.totalorder 2, %s9
    // Predicated region
    $region37: #{tpu_custom_call.1} parent=5 // pred_check
      %p711 = pneg %p710
    $region38: #{tpu_custom_call.1} parent=5 // pred_check_branch
      %713 = sbr.rel (%p711) target = $region40
    $region39: #{tpu_custom_call.1} parent=5 // pred_region
      %s714 = ssub.s32 %s9, 2
      // Predicated region
      $region41: #{tpu_custom_call.1} parent=39 // pred_check
        %p715 = pneg %p106
      $region42: #{tpu_custom_call.1} parent=39 // pred_check_branch
        %717 = sbr.rel (%p715) target = $region44
      $region43: #{tpu_custom_call.1} parent=39 // pred_region
        %s718 = smul.u32 64, %s15
        %p719 = scmp.lt.s32.totalorder %s718, 1023
        %s720 = scalar_select %p719, %s718, 1023
        %s721 = smul.addr %s720, 4
        %s722 = scalar_lea.vmem %s3, %s721
      $region44: #{tpu_custom_call.1} parent=39 // pred_fallthru
        _
    $region40: #{tpu_custom_call.1} parent=5 // pred_fallthru
      _
  $region6: #{tpu_custom_call.1} parent=0 // loop_footer
    %s13 = sadd.s32 1, %s9
  $region7: #{tpu_custom_call.1} parent=0 // loop_footer_branch
    %8 = sbr.rel target = $region3
  $region8: #{tpu_custom_call.1} parent=0 // loop_exit
    _

</llo_original>
